<compile_context>
chip_gen: v5e
topology: v5e:2x2
jax: 0.10.0
libtpu: 0.0.40
codegen_flags: <defaults>
</compile_context>

<pallas_src>
import math

import jax
import jax.numpy as jnp
from jax.experimental import pallas as pl
from jax.experimental.pallas import tpu as pltpu


def _gaussian_1d(radius: int, sigma: float):
    """1-D factor of the module's unnormalized 2-D Gaussian (outer product reproduces it)."""
    return [math.exp(-((i - radius) ** 2) / (2.0 * sigma * sigma))
            for i in range(2 * radius + 1)]


def _vmem_capacity_bytes() -> int:
    try:
        return int(pltpu.get_tpu_info().vmem_capacity_bytes)
    except Exception:
        return 64 * 1024 * 1024  # v7x-safe default


# Keep per-step live vector values (f32) around <= 1 MiB so Mosaic unroll / spill stays sane.
_VALUE_CAP = 1 << 20


def _step_bytes(tm, th, W, R, isz, osz, has_halo):
    """Accurate per-grid-step VMEM bytes: double-buffered operands + single scratches."""
    thp, wp = th + 2 * R, W + 2 * R
    b = 2 * tm * th * W * isz            # input strip   (x2 pipeline buffers)
    b += 2 * tm * th * W * osz           # output strip  (x2 pipeline buffers)
    if has_halo:
        b += 2 * 2 * tm * 8 * W * isz    # two 8-row halo blocks (x2 pipeline buffers)
    b += tm * thp * wp * isz             # halo'd input scratch (single)
    b += tm * thp * W * 4                # horizontal-pass scratch (single, f32)
    return b


def _fits(tm, th, H, W, R, isz, osz, budget):
    has_halo = th < H
    thp, wp = th + 2 * R, W + 2 * R
    return (_step_bytes(tm, th, W, R, isz, osz, has_halo) <= budget
            and tm * thp * wp * 4 <= _VALUE_CAP)


def _choose_tiles(M, H, W, R, isz, osz, budget, tile_m=None, tile_h=None):
    # H strip: start from the whole image and halve (multiples of 8 dividing H) until a
    # single-plane step fits the per-generation budget.
    if tile_h is not None:
        TH = tile_h
    else:
        TH = H
        if H % 8 == 0:
            while TH > 8 and not _fits(1, TH, H, W, R, isz, osz, budget):
                nxt = TH // 2
                if nxt % 8 == 0 and H % nxt == 0:
                    TH = nxt
                else:
                    break
        # TODO(synk): also tile W for images whose single 8-row strip still exceeds VMEM.
    # Plane tile: grow by doubling while it divides M and fits.
    if tile_m is not None:
        TM = tile_m
    else:
        TM = 1
        while M % (2 * TM) == 0 and _fits(2 * TM, TH, H, W, R, isz, osz, budget):
            TM *= 2
        # Megacore: make sure the grid has >= 2 steps so both v7x TensorCores get work.
        if (M // TM) * (H // TH) < 2 and TM % 2 == 0:
            TM //= 2
    return TM, TH


def _make_kernel(*, TM, TH, W, NH, R, w1, has_halo, in_dtype, out_dtype):
    THP, WP = TH + 2 * R, W + 2 * R
    K = 2 * R + 1

    def kernel(*refs):
        if has_halo:
            x_ref, up_ref, dn_ref, out_ref, pad_ref, tmp_ref = refs
        else:
            x_ref, out_ref, pad_ref, tmp_ref = refs
        h = pl.program_id(1)

        # Hoisted zero-fill: the scratch persists across grid steps and the per-step writes
        # below only touch lanes [0, W), so the circular zero-lane halo stays zero.  h == 0 is
        # the first strip of every plane-tile on every core (M is the "parallel" axis, the
        # H-strip axis is "arbitrary"/sequential per core), so each core zeroes before use.
        @pl.when(h == 0)
        def _():
            pad_ref[...] = jnp.zeros((TM, THP, WP), in_dtype)

        # Current strip sits at pad rows [R, R+TH); rows above/below come from the 8-row halo
        # blocks (or remain zero at the image edges).
        pad_ref[:, R:R + TH, :W] = x_ref[...]
        if has_halo:
            @pl.when(h > 0)
            def _():
                pad_ref[:, :R, :W] = up_ref[:, 8 - R:, :]

            @pl.when(h < NH - 1)
            def _():
                pad_ref[:, R + TH:, :W] = dn_ref[:, :R, :]

            @pl.when(h == NH - 1)
            def _():
                pad_ref[:, R + TH:, :W] = jnp.zeros((TM, R, W), in_dtype)

        # ---- horizontal (W / lane) pass: 1 load + 2R XLU rolls; centre tap weight == 1 ----
        # Circular trick: lanes [W, WP) are zero, so wrap-around lanes supply the zero padding
        # and lanes [0, W) of the accumulated sum are exactly the zero-padded correlation.
        padv = pad_ref[...].astype(jnp.float32)
        hacc = padv                                      # centre tap, exp(0) == 1: no multiply
        for j in range(K):
            if j == R:
                continue
            hacc = hacc + jnp.float32(w1[j]) * pltpu.roll(padv, shift=(R - j) % WP, axis=2)
        tmp_ref[...] = hacc[:, :, :W]

        # ---- vertical (H / sublane) pass: offset loads from scratch; centre tap weight == 1 ----
        acc = tmp_ref[:, R:R + TH, :]
        for i in range(K):
            if i == R:
                continue
            acc = acc + jnp.float32(w1[i]) * tmp_ref[:, i:i + TH, :]
        out_ref[...] = acc.astype(out_dtype)

        # TODO(synk): on v6e/v7x the VALU still binds; the vertical pass could be offloaded to
        # the idle MXU as a banded-Toeplitz (TH x THP) matmul for a further ~25-35%.

    return kernel


def gaussian_blur2d(x: jax.Array, radius: int = 2, sigma: float = 1.0, *,
                    tile_m=None, tile_h=None) -> jax.Array:
    """Equivalent of GaussianBlur2D(radius, sigma).forward(x) for NCHW input."""
    B, C, H, W = x.shape
    M = B * C
    R = int(radius)
    if R == 0:
        return x                                     # kernel == [[1.]]  -> identity
    w1 = _gaussian_1d(R, sigma)

    # Native layout: (B, C, H, W) -> (M, H, W) is a free reshape (no HBM relayout), W on lanes.
    xm = x.reshape(M, H, W)

    isz = osz = x.dtype.itemsize
    cap = _vmem_capacity_bytes()                     # 64 MiB on v7x, 128 MiB on v5e/v6e
    budget = int(0.4 * cap)
    TM, TH = _choose_tiles(M, H, W, R, isz, osz, budget, tile_m, tile_h)
    assert M % TM == 0 and H % TH == 0 and (TH % 8 == 0 or TH == H)
    NM, NH = M // TM, H // TH
    has_halo = NH > 1
    THP, WP = TH + 2 * R, W + 2 * R

    kernel = _make_kernel(TM=TM, TH=TH, W=W, NH=NH, R=R, w1=w1, has_halo=has_halo,
                          in_dtype=x.dtype, out_dtype=x.dtype)

    in_specs = [pl.BlockSpec((TM, TH, W), lambda m, h: (m, h, 0))]
    operands = [xm]
    if has_halo:
        th8, h8 = TH // 8, H // 8
        # 8-row blocks just above / below the strip (only ~16/TH extra rows re-read per strip).
        # At the image edges the index is wrapped back into range; the kernel ignores it there.
        in_specs.append(pl.BlockSpec((TM, 8, W),
                                     lambda m, h: (m, (h * th8 + h8 - 1) % h8, 0)))
        in_specs.append(pl.BlockSpec((TM, 8, W),
                                     lambda m, h: (m, ((h + 1) * th8) % h8, 0)))
        operands += [xm, xm]

    need = _step_bytes(TM, TH, W, R, isz, osz, has_halo)
    vmem_limit = int(min(int(0.9 * cap), max(32 * 1024 * 1024, 2 * need + (8 << 20))))

    out = pl.pallas_call(
        kernel,
        out_shape=jax.ShapeDtypeStruct((M, H, W), x.dtype),
        grid=(NM, NH),
        in_specs=in_specs,
        out_specs=pl.BlockSpec((TM, TH, W), lambda m, h: (m, h, 0)),
        scratch_shapes=[
            pltpu.VMEM((TM, THP, WP), x.dtype),      # halo'd input strip (circular zero lanes)
            pltpu.VMEM((TM, THP, W), jnp.float32),   # horizontal-pass result
        ],
        compiler_params=pltpu.CompilerParams(
            dimension_semantics=("parallel", "arbitrary"),
            vmem_limit_bytes=vmem_limit,
        ),
    )(*operands)

    return out.reshape(B, C, H, W)


def _reference_blur(x, radius=2, sigma=1.0):
    """Pure-JAX reference with the module's exact semantics (unnormalized kernel, zero pad)."""
    B, C, H, W = x.shape
    K = 2 * radius + 1
    d = jnp.arange(-radius, radius + 1, dtype=jnp.float32)
    dist2 = (d[:, None] ** 2 + d[None, :] ** 2) / jnp.float32(sigma * sigma)
    kern = jnp.exp(-0.5 * dist2)          # norm.pdf(dist)/norm.pdf(0): NOT normalized to sum 1
    xp = jnp.pad(x, ((0, 0), (0, 0), (radius, radius), (radius, radius)))
    acc = jnp.zeros(x.shape, jnp.float32)
    for i in range(K):
        for j in range(K):
            acc = acc + kern[i, j] * xp[:, :, i:i + H, j:j + W].astype(jnp.float32)
    return acc.astype(x.dtype)


if __name__ == "__main__":
    key = jax.random.PRNGKey(0)
    B, C, H, W = 2, 4, 16, 16
    x = jax.random.normal(key, (B, C, H, W), dtype=jnp.float32)

    y_ref = jax.block_until_ready(_reference_blur(x, radius=2, sigma=1.0))

    # Default tiling: full-H strip, plane axis split so the grid has >= 2 steps.
    y = jax.block_until_ready(gaussian_blur2d(x, radius=2, sigma=1.0))
    assert y.shape == (B, C, H, W)
    assert jnp.allclose(y, y_ref, atol=1e-5, rtol=1e-5), float(jnp.max(jnp.abs(y - y_ref)))

    # Forced H-strip tiling: exercises the halo-block path that large images take.
    y2 = jax.block_until_ready(gaussian_blur2d(x, radius=2, sigma=1.0, tile_h=8))
    assert jnp.allclose(y2, y_ref, atol=1e-5, rtol=1e-5), float(jnp.max(jnp.abs(y2 - y_ref)))

    print("KERNEL_OK")
</pallas_src>

<mosaic_0001>
module attributes {stable_mosaic.version = 11 : i64} {
  func.func @kernel(%arg0: i32, %arg1: i32, %arg2: memref<4x16x16xf32, #tpu.memory_space<vmem>>, %arg3: memref<4x16x16xf32, #tpu.memory_space<vmem>>, %arg4: memref<4x20x20xf32, #tpu.memory_space<vmem>>, %arg5: memref<4x20x16xf32, #tpu.memory_space<vmem>>) attributes {dimension_semantics = [#tpu.dimension_semantics<parallel>, #tpu.dimension_semantics<arbitrary>], iteration_bounds = array<i64: 2, 1>, scalar_prefetch = 0 : i64, scratch_operands = 2 : i64, tpu.core_type = #tpu.core_type<tc>, window_params = [{transform_indices = @transform_0, window_bounds = array<i64: 4, 16, 16>}, {transform_indices = @transform_1, window_bounds = array<i64: 4, 16, 16>}]} {
    %c0_i32 = arith.constant 0 : i32
    %0 = arith.cmpi eq, %arg1, %c0_i32 : i32
    %1 = arith.extui %0 : i1 to i32
    %c0_i32_0 = arith.constant 0 : i32
    %2 = arith.cmpi ne, %1, %c0_i32_0 : i32
    scf.if %2 {
      %cst_33 = arith.constant 0.000000e+00 : f32
      %42 = vector.broadcast %cst_33 : f32 to vector<4x20x20xf32>
      %c0_34 = arith.constant 0 : index
      %c0_35 = arith.constant 0 : index
      %c0_36 = arith.constant 0 : index
      %43 = vector.load %arg4[%c0_34, %c0_35, %c0_36] : memref<4x20x20xf32, #tpu.memory_space<vmem>>, vector<4x20x20xf32>
      tpu.vector_store %arg4[%c0_34, %c0_35, %c0_36], %42 {strides = array<i32>} : memref<4x20x20xf32, #tpu.memory_space<vmem>>, vector<4x20x20xf32>,
    } else {
    }
    %c0 = arith.constant 0 : index
    %c0_1 = arith.constant 0 : index
    %c0_2 = arith.constant 0 : index
    %3 = vector.load %arg2[%c0, %c0_1, %c0_2] : memref<4x16x16xf32, #tpu.memory_space<vmem>>, vector<4x16x16xf32>
    %c0_3 = arith.constant 0 : index
    %c2 = arith.constant 2 : index
    %c0_4 = arith.constant 0 : index
    %4 = vector.load %arg4[%c0_3, %c2, %c0_4] : memref<4x20x20xf32, #tpu.memory_space<vmem>>, vector<4x16x16xf32>
    tpu.vector_store %arg4[%c0_3, %c2, %c0_4], %3 {strides = array<i32>} : memref<4x20x20xf32, #tpu.memory_space<vmem>>, vector<4x16x16xf32>,
    %c0_5 = arith.constant 0 : index
    %c0_6 = arith.constant 0 : index
    %c0_7 = arith.constant 0 : index
    %5 = vector.load %arg4[%c0_5, %c0_6, %c0_7] : memref<4x20x20xf32, #tpu.memory_space<vmem>>, vector<4x20x20xf32>
    %c2_i32 = arith.constant 2 : i32
    %6 = tpu.dynamic_rotate %5 by %c2_i32 dim 2 : vector<4x20x20xf32>, i32 -> vector<4x20x20xf32>
    %cst = arith.constant 0.135335281 : f32
    %7 = vector.broadcast %cst : f32 to vector<4x20x20xf32>
    %8 = arith.mulf %7, %6 : vector<4x20x20xf32>
    %9 = arith.addf %5, %8 : vector<4x20x20xf32>
    %c1_i32 = arith.constant 1 : i32
    %10 = tpu.dynamic_rotate %5 by %c1_i32 dim 2 : vector<4x20x20xf32>, i32 -> vector<4x20x20xf32>
    %cst_8 = arith.constant 0.606530666 : f32
    %11 = vector.broadcast %cst_8 : f32 to vector<4x20x20xf32>
    %12 = arith.mulf %11, %10 : vector<4x20x20xf32>
    %13 = arith.addf %9, %12 : vector<4x20x20xf32>
    %c19_i32 = arith.constant 19 : i32
    %14 = tpu.dynamic_rotate %5 by %c19_i32 dim 2 : vector<4x20x20xf32>, i32 -> vector<4x20x20xf32>
    %cst_9 = arith.constant 0.606530666 : f32
    %15 = vector.broadcast %cst_9 : f32 to vector<4x20x20xf32>
    %16 = arith.mulf %15, %14 : vector<4x20x20xf32>
    %17 = arith.addf %13, %16 : vector<4x20x20xf32>
    %c18_i32 = arith.constant 18 : i32
    %18 = tpu.dynamic_rotate %5 by %c18_i32 dim 2 : vector<4x20x20xf32>, i32 -> vector<4x20x20xf32>
    %cst_10 = arith.constant 0.135335281 : f32
    %19 = vector.broadcast %cst_10 : f32 to vector<4x20x20xf32>
    %20 = arith.mulf %19, %18 : vector<4x20x20xf32>
    %21 = arith.addf %17, %20 : vector<4x20x20xf32>
    %22 = vector.extract_strided_slice %21 {offsets = [0, 0, 0], sizes = [4, 20, 16], strides = [1, 1, 1]} : vector<4x20x20xf32> to vector<4x20x16xf32>
    %c0_11 = arith.constant 0 : index
    %c0_12 = arith.constant 0 : index
    %c0_13 = arith.constant 0 : index
    %23 = vector.load %arg5[%c0_11, %c0_12, %c0_13] : memref<4x20x16xf32, #tpu.memory_space<vmem>>, vector<4x20x16xf32>
    tpu.vector_store %arg5[%c0_11, %c0_12, %c0_13], %22 {strides = array<i32>} : memref<4x20x16xf32, #tpu.memory_space<vmem>>, vector<4x20x16xf32>,
    %c0_14 = arith.constant 0 : index
    %c2_15 = arith.constant 2 : index
    %c0_16 = arith.constant 0 : index
    %24 = vector.load %arg5[%c0_14, %c2_15, %c0_16] : memref<4x20x16xf32, #tpu.memory_space<vmem>>, vector<4x16x16xf32>
    %c0_17 = arith.constant 0 : index
    %c0_18 = arith.constant 0 : index
    %c0_19 = arith.constant 0 : index
    %25 = vector.load %arg5[%c0_17, %c0_18, %c0_19] : memref<4x20x16xf32, #tpu.memory_space<vmem>>, vector<4x16x16xf32>
    %cst_20 = arith.constant 0.135335281 : f32
    %26 = vector.broadcast %cst_20 : f32 to vector<4x16x16xf32>
    %27 = arith.mulf %26, %25 : vector<4x16x16xf32>
    %28 = arith.addf %24, %27 : vector<4x16x16xf32>
    %c0_21 = arith.constant 0 : index
    %c1 = arith.constant 1 : index
    %c0_22 = arith.constant 0 : index
    %29 = vector.load %arg5[%c0_21, %c1, %c0_22] : memref<4x20x16xf32, #tpu.memory_space<vmem>>, vector<4x16x16xf32>
    %cst_23 = arith.constant 0.606530666 : f32
    %30 = vector.broadcast %cst_23 : f32 to vector<4x16x16xf32>
    %31 = arith.mulf %30, %29 : vector<4x16x16xf32>
    %32 = arith.addf %28, %31 : vector<4x16x16xf32>
    %c0_24 = arith.constant 0 : index
    %c3 = arith.constant 3 : index
    %c0_25 = arith.constant 0 : index
    %33 = vector.load %arg5[%c0_24, %c3, %c0_25] : memref<4x20x16xf32, #tpu.memory_space<vmem>>, vector<4x16x16xf32>
    %cst_26 = arith.constant 0.606530666 : f32
    %34 = vector.broadcast %cst_26 : f32 to vector<4x16x16xf32>
    %35 = arith.mulf %34, %33 : vector<4x16x16xf32>
    %36 = arith.addf %32, %35 : vector<4x16x16xf32>
    %c0_27 = arith.constant 0 : index
    %c4 = arith.constant 4 : index
    %c0_28 = arith.constant 0 : index
    %37 = vector.load %arg5[%c0_27, %c4, %c0_28] : memref<4x20x16xf32, #tpu.memory_space<vmem>>, vector<4x16x16xf32>
    %cst_29 = arith.constant 0.135335281 : f32
    %38 = vector.broadcast %cst_29 : f32 to vector<4x16x16xf32>
    %39 = arith.mulf %38, %37 : vector<4x16x16xf32>
    %40 = arith.addf %36, %39 : vector<4x16x16xf32>
    %c0_30 = arith.constant 0 : index
    %c0_31 = arith.constant 0 : index
    %c0_32 = arith.constant 0 : index
    %41 = vector.load %arg3[%c0_30, %c0_31, %c0_32] : memref<4x16x16xf32, #tpu.memory_space<vmem>>, vector<4x16x16xf32>
    tpu.vector_store %arg3[%c0_30, %c0_31, %c0_32], %40 {strides = array<i32>} : memref<4x16x16xf32, #tpu.memory_space<vmem>>, vector<4x16x16xf32>,
    return
  }
  func.func @transform_0(%arg0: i32, %arg1: i32) -> (i32, i32, i32) {
    %c0_i32 = arith.constant 0 : i32
    %c0_i32_0 = arith.constant 0 : i32
    return %arg0, %arg1, %c0_i32 : i32, i32, i32
  }
  func.func @transform_1(%arg0: i32, %arg1: i32) -> (i32, i32, i32) {
    %c0_i32 = arith.constant 0 : i32
    %c0_i32_0 = arith.constant 0 : i32
    return %arg0, %arg1, %c0_i32 : i32, i32, i32
  }
}

</mosaic_0001>

<llo_original>
// kernel: tpu_custom_call.1
$region0: #{tpu_custom_call.1}
  #allocation0 [shape = 'u32[]', space=smem, size = 0x4, offset = 0x4, fixed_abs, tag = 'smem constant byte address 0x4 - core index']
  #allocation1 [shape = 'u32[72,128]{1,0:T(1,128)}', space=vmem, size = 0x9000, scoped, tag = 'internal scratch']
  #allocation2 [shape = 'f32[4,20,20]{2,1,0:T(8,128)}', space=vmem, size = 0xc000, scoped, tag = 'scratch operand']
  #allocation3 [shape = 'f32[4,20,16]{2,1,0:T(8,128)}', space=vmem, size = 0xc000, scoped, tag = 'scratch operand']
  %s0 = inlined_call_operand.hbm [shape: f32[8,16,16], index: 0, kind: input, shape index: {}]
  %s1 = inlined_call_operand.hbm [shape: f32[8,16,16], index: 1, kind: output, shape index: {}]
  %s2 = sld [smem:[#allocation0]]
  $region45: #{tpu_custom_call.1} parent=0
    _
  %s4 = ssub.s32 1, %s2
  %s5 = scalar_select 0, %s4, %s2
  $region1: #{tpu_custom_call.1} parent=0
    #allocation4 [shape = 'u8[65536]{0}', space=vmem, size = 0x10000, scoped, tag = 'input window, operand 0']
    #allocation5 [shape = 's32[2]{0}', space=sflag, size = 0x8, scoped, tag = 'scoped memory for tpu_custom_call.1']
    #allocation6 [shape = 's32[2]{0}', space=sflag, size = 0x8, scoped, tag = 'scoped memory for tpu_custom_call.1']
    #allocation7 [shape = 'u8[65536]{0}', space=vmem, size = 0x10000, scoped, tag = 'output window, operand 0']
    %6 = vsyncpa [#allocation5], 0
    %s7 = scalar_lea.sflag [#allocation5], 1
    %8 = vsyncpa %s7, 0
    %9 = vsyncpa [#allocation6], 0
    %s10 = scalar_lea.sflag [#allocation6], 1
    %11 = vsyncpa %s10, 0
    loop: start=0, step=1, limit=4
    $region2: #{tpu_custom_call.1} parent=1 // loop_pre_header
      _
    $region3: #{tpu_custom_call.1} parent=1 // loop_header
      %s13 = sphi 0, %s17
      %p14 = scmp.ge.s32.totalorder %s13, 4
      %s20 = sphi 0, %s32
      %s21 = sphi 0, %s28
      %s22 = sphi 0, %s20
      %s23 = sphi 0, %s21
      %s24 = sphi 0, %s22
      %s25 = sphi 0, %s23
      %s37 = sphi 0, %s39
      %s40 = sphi 0, %s37
      %s41 = sphi 0, %s40
      %s57 = sphi 0, %s41
      %s65 = sphi 0, %s67
      %s68 = sphi 0, %s65
      %s69 = sphi 0, %s68
      %s85 = sphi 0, %s69
    $region4: #{tpu_custom_call.1} parent=1 // loop_header_branch
      %16 = sbr.rel (%p14) target = $region8
    $region5: #{tpu_custom_call.1} parent=1 // loop_body
      %s18 = ssub.s32 %s13, 1
      %s19 = ssub.s32 %s13, 2
      %s26 = sadd.s32 1, %s21
      %p27 = scmp.ge.s32.totalorder %s26, 1
      %s28 = scalar_select %p27, 0, %s26
      %s29 = sadd.s32 1, %s20
      %s30 = scalar_select %p27, %s29, %s20
      %p31 = scmp.ge.s32.totalorder %s30, 2
      %s32 = scalar_select %p31, 0, %s30
      %s33 = ssub.s32 %s20, %s32
      %s34 = ssub.s32 %s21, %s28
      %s35 = sor.u32 %s33, %s34
      %p36 = scmp.eq.s32.totalorder %s35, 0
      %s38 = sadd.s32 %s37, 1
      %s39 = scalar_select %p36, %s37, %s38
      %p42 = pneg %p36
      %p43 = scmp.eq.s32.totalorder %s13, 1
      %p44 = por %p42, %p43
      %p45 = scmp.ne.s32.totalorder %s37, %s40
      %p46 = scmp.eq.s32.totalorder %s13, 0
      %p47 = por %p45, %p46
      %p48 = scmp.ne.s32.totalorder %s37, %s40
      %p49 = scmp.eq.s32.totalorder %s18, 1
      %p50 = por %p48, %p49
      %p51 = scmp.ne.s32.totalorder %s40, %s41
      %p52 = scmp.eq.s32.totalorder %s18, 0
      %p53 = por %p51, %p52
      %p54 = scmp.ne.s32.totalorder %s40, %s41
      %p55 = scmp.eq.s32.totalorder %s19, 1
      %p56 = por %p54, %p55
      %p58 = scmp.ne.s32.totalorder %s41, %s57
      %p59 = scmp.eq.s32.totalorder %s19, 0
      %p60 = por %p58, %p59
      %s61 = ssub.s32 %s20, %s32
      %s62 = ssub.s32 %s21, %s28
      %s63 = sor.u32 %s61, %s62
      %p64 = scmp.eq.s32.totalorder %s63, 0
      %s66 = sadd.s32 %s65, 1
      %s67 = scalar_select %p64, %s65, %s66
      %p70 = pneg %p64
      %p71 = scmp.eq.s32.totalorder %s13, 1
      %p72 = por %p70, %p71
      %p73 = scmp.ne.s32.totalorder %s65, %s68
      %p74 = scmp.eq.s32.totalorder %s13, 0
      %p75 = por %p73, %p74
      %p76 = scmp.ne.s32.totalorder %s65, %s68
      %p77 = scmp.eq.s32.totalorder %s18, 1
      %p78 = por %p76, %p77
      %p79 = scmp.ne.s32.totalorder %s68, %s69
      %p80 = scmp.eq.s32.totalorder %s18, 0
      %p81 = por %p79, %p80
      %p82 = scmp.ne.s32.totalorder %s68, %s69
      %p83 = scmp.eq.s32.totalorder %s19, 1
      %p84 = por %p82, %p83
      %p86 = scmp.ne.s32.totalorder %s69, %s85
      %p87 = scmp.eq.s32.totalorder %s19, 0
      %p88 = por %p86, %p87
      %p89 = scmp.le.s32.totalorder 1, %s13
      %p90 = scmp.lt.s32.totalorder %s13, 3
      %p91 = pnand %p89, %p90
      %p92 = pneg %p91
      // Predicated region
      $region9: #{tpu_custom_call.1} parent=5 // pred_check
        _
      $region10: #{tpu_custom_call.1} parent=5 // pred_check_branch
        %94 = sbr.rel (%p91) target = $region12
      $region11: #{tpu_custom_call.1} parent=5 // pred_region
        %s95 = ssub.s32 %s13, 1
      $region12: #{tpu_custom_call.1} parent=5 // pred_fallthru
        _
      %p96 = scmp.lt.s32.totalorder %s13, 2
      // Predicated region
      $region13: #{tpu_custom_call.1} parent=5 // pred_check
        %p97 = pneg %p96
      $region14: #{tpu_custom_call.1} parent=5 // pred_check_branch
        %99 = sbr.rel (%p97) target = $region16
      $region15: #{tpu_custom_call.1} parent=5 // pred_region
        // Predicated region
        $region17: #{tpu_custom_call.1} parent=15 // pred_check
          %p100 = pneg %p47
        $region18: #{tpu_custom_call.1} parent=15 // pred_check_branch
          %102 = sbr.rel (%p100) target = $region20
        $region19: #{tpu_custom_call.1} parent=15 // pred_region
          %s103 = sand.u32 %s37, 1
          %s104 = scalar_lea.sflag [#allocation5], %s103
          %s105 = sand.u32 %s37, 1
          %s106 = smul.addr %s105, 64
          %s107 = scalar_lea.vmem [#allocation4], %s106
          %s108 = smul.u32 4, %s20
          %s109 = smul.u32 2, %s21
          %111 = vsyncadd %s104, 0
          %s112 = smul.addr %s108, 2
          %s113 = sadd.s32 %s109, %s112
          %s114 = smul.addr %s113, 8
          %s115 = scalar_lea.hbm %s0, %s114
          %s116 = sshll.u32 %s115, 4
          %s117 = int_to_ptr.hbm [resolvable:$true] %s116
          %s118 = sshll.u32 %s107, 4
          %s119 = int_to_ptr.vmem [resolvable:$true] %s118
          %124 = dma.hbm_to_vmem [thread:$0]  %s117, 1024, %s119, %s104, 128, 128, 8
        $region20: #{tpu_custom_call.1} parent=15 // pred_fallthru
          _
      $region16: #{tpu_custom_call.1} parent=5 // pred_fallthru
        _
      %p125 = scmp.le.s32.totalorder 1, %s13
      %p126 = scmp.lt.s32.totalorder %s13, 3
      %p127 = pnand %p125, %p126
      %p128 = pneg %p127
      // Predicated region
      $region21: #{tpu_custom_call.1} parent=5 // pred_check
        _
      $region22: #{tpu_custom_call.1} parent=5 // pred_check_branch
        %130 = sbr.rel (%p127) target = $region24
      $region23: #{tpu_custom_call.1} parent=5 // pred_region
        %s131 = ssub.s32 %s13, 1
        %s132 = sand.u32 %s40, 1
        %s133 = scalar_lea.sflag [#allocation5], %s132
        %s134 = sand.u32 %s40, 1
        %s135 = smul.addr %s134, 64
        %s136 = scalar_lea.vmem [#allocation4], %s135
        // Predicated region
        $region25: #{tpu_custom_call.1} parent=23 // pred_check
          %p137 = pneg %p53
        $region26: #{tpu_custom_call.1} parent=23 // pred_check_branch
          %139 = sbr.rel (%p137) target = $region28
        $region27: #{tpu_custom_call.1} parent=23 // pred_region
          %141 = dma.done %s133, 1024
        $region28: #{tpu_custom_call.1} parent=23 // pred_fallthru
          _
        %s142 = sand.u32 %s40, 1
        %s143 = scalar_lea.sflag [#allocation5], %s142
        %s144 = sand.u32 %s40, 1
        %s145 = smul.addr %s144, 64
        %s146 = scalar_lea.vmem [#allocation4], %s145
        %p147 = pneg %p53
        %p148 = pneg %p50
        %p149 = pneg %p81
        %p150 = pneg %p78
        %s151 = sand.u32 %s68, 1
        %s152 = scalar_lea.sflag [#allocation6], %s151
        %s153 = sand.u32 %s68, 1
        %s154 = smul.addr %s153, 64
        %s155 = scalar_lea.vmem [#allocation7], %s154
        %s156 = smul.u32 4, %s22
        %s157 = smul.u32 2, %s23
        %s158 = smul.u32 4, %s22
        %s159 = smul.u32 2, %s23
        %p160 = scmp.eq.s32.totalorder %s23, 0
        // Predicated region
        $region29: #{tpu_custom_call.1} parent=23 // pred_check
          %p161 = pneg %p160
        $region30: #{tpu_custom_call.1} parent=23 // pred_check_branch
          %163 = sbr.rel (%p161) target = $region32
        $region31: #{tpu_custom_call.1} parent=23 // pred_region
          %vm164 = vcmask 162816
          %165 = vst.msk [vmem:[#allocation2] sm:$0xff] %vm164, 0.0
          %166 = vst.msk [vmem:[#allocation2 + $0x8] sm:$0xff] %vm164, 0.0
          %vm167 = vcmask 158720
          %168 = vst.msk [vmem:[#allocation2 + $0x10] sm:$0xf] %vm167, 0.0
          %169 = vst.msk [vmem:[#allocation2 + $0x18] sm:$0xff] %vm164, 0.0
          %170 = vst.msk [vmem:[#allocation2 + $0x20] sm:$0xff] %vm164, 0.0
          %171 = vst.msk [vmem:[#allocation2 + $0x28] sm:$0xf] %vm167, 0.0
          %172 = vst.msk [vmem:[#allocation2 + $0x30] sm:$0xff] %vm164, 0.0
          %173 = vst.msk [vmem:[#allocation2 + $0x38] sm:$0xff] %vm164, 0.0
          %174 = vst.msk [vmem:[#allocation2 + $0x40] sm:$0xf] %vm167, 0.0
          %175 = vst.msk [vmem:[#allocation2 + $0x48] sm:$0xff] %vm164, 0.0
          %176 = vst.msk [vmem:[#allocation2 + $0x50] sm:$0xff] %vm164, 0.0
          %177 = vst.msk [vmem:[#allocation2 + $0x58] sm:$0xf] %vm167, 0.0
        $region32: #{tpu_custom_call.1} parent=23 // pred_fallthru
          _
        %v178 = vld [vmem:[%s136] sm:$0xff]
        %v179 = vld [vmem:[%s136 + $0x8] sm:$0xff]
        %v180 = vld [vmem:[%s136 + $0x10] sm:$0xff]
        %v181 = vld [vmem:[%s136 + $0x18] sm:$0xff]
        %v182 = vld [vmem:[%s136 + $0x20] sm:$0xff]
        %v183 = vld [vmem:[%s136 + $0x28] sm:$0xff]
        %v184 = vld [vmem:[%s136 + $0x30] sm:$0xff]
        %v185 = vld [vmem:[%s136 + $0x38] sm:$0xff]
        %vm186 = vcmask 130048
        %187 = vst.msk [vmem:[#allocation2 + $0x2] sm:$0xff] %vm186, %v178
        %188 = vst.msk [vmem:[#allocation2 + $0xa] sm:$0xff] %vm186, %v179
        %189 = vst.msk [vmem:[#allocation2 + $0x1a] sm:$0xff] %vm186, %v180
        %190 = vst.msk [vmem:[#allocation2 + $0x22] sm:$0xff] %vm186, %v181
        %191 = vst.msk [vmem:[#allocation2 + $0x32] sm:$0xff] %vm186, %v182
        %192 = vst.msk [vmem:[#allocation2 + $0x3a] sm:$0xff] %vm186, %v183
        %193 = vst.msk [vmem:[#allocation2 + $0x4a] sm:$0xff] %vm186, %v184
        %194 = vst.msk [vmem:[#allocation2 + $0x52] sm:$0xff] %vm186, %v185
        %v195 = vld [vmem:[#allocation2] sm:$0xff]
        %v196 = vld [vmem:[#allocation2 + $0x8] sm:$0xff]
        %v197 = vld [vmem:[#allocation2 + $0x10] sm:$0xf]
        %v198 = vld [vmem:[#allocation2 + $0x18] sm:$0xff]
        %v199 = vld [vmem:[#allocation2 + $0x20] sm:$0xff]
        %v200 = vld [vmem:[#allocation2 + $0x28] sm:$0xf]
        %v201 = vld [vmem:[#allocation2 + $0x30] sm:$0xff]
        %v202 = vld [vmem:[#allocation2 + $0x38] sm:$0xff]
        %v203 = vld [vmem:[#allocation2 + $0x40] sm:$0xf]
        %v204 = vld [vmem:[#allocation2 + $0x48] sm:$0xff]
        %v205 = vld [vmem:[#allocation2 + $0x50] sm:$0xff]
        %v206 = vld [vmem:[#allocation2 + $0x58] sm:$0xf]
        %vm207 = vcmask 1047712
        %208 = vrot.lane.b32.xlu0 %v195, 20
        %v209 = vpop.permute.xlu0 %208
        %v210 = vsel %vm207, %v209, %v195
        %211 = vrot.lane.b32.xlu0 %v196, 20
        %v212 = vpop.permute.xlu0 %211
        %v213 = vsel %vm207, %v212, %v196
        %214 = vrot.lane.b32.xlu0 %v197, 20
        %v215 = vpop.permute.xlu0 %214
        %v216 = vsel %vm207, %v215, %v197
        %217 = vrot.lane.b32.xlu0 %v198, 20
        %v218 = vpop.permute.xlu0 %217
        %v219 = vsel %vm207, %v218, %v198
        %220 = vrot.lane.b32.xlu0 %v199, 20
        %v221 = vpop.permute.xlu0 %220
        %v222 = vsel %vm207, %v221, %v199
        %223 = vrot.lane.b32.xlu0 %v200, 20
        %v224 = vpop.permute.xlu0 %223
        %v225 = vsel %vm207, %v224, %v200
        %226 = vrot.lane.b32.xlu0 %v201, 20
        %v227 = vpop.permute.xlu0 %226
        %v228 = vsel %vm207, %v227, %v201
        %229 = vrot.lane.b32.xlu0 %v202, 20
        %v230 = vpop.permute.xlu0 %229
        %v231 = vsel %vm207, %v230, %v202
        %232 = vrot.lane.b32.xlu0 %v203, 20
        %v233 = vpop.permute.xlu0 %232
        %v234 = vsel %vm207, %v233, %v203
        %235 = vrot.lane.b32.xlu0 %v204, 20
        %v236 = vpop.permute.xlu0 %235
        %v237 = vsel %vm207, %v236, %v204
        %238 = vrot.lane.b32.xlu0 %v205, 20
        %v239 = vpop.permute.xlu0 %238
        %v240 = vsel %vm207, %v239, %v205
        %241 = vrot.lane.b32.xlu0 %v206, 20
        %v242 = vpop.permute.xlu0 %241
        %v243 = vsel %vm207, %v242, %v206
        %244 = vrot.lane.b32.xlu0 %v210, 20
        %v245 = vpop.permute.xlu0 %244
        %246 = vrot.lane.b32.xlu0 %v213, 20
        %v247 = vpop.permute.xlu0 %246
        %248 = vrot.lane.b32.xlu0 %v216, 20
        %v249 = vpop.permute.xlu0 %248
        %250 = vrot.lane.b32.xlu0 %v219, 20
        %v251 = vpop.permute.xlu0 %250
        %252 = vrot.lane.b32.xlu0 %v222, 20
        %v253 = vpop.permute.xlu0 %252
        %254 = vrot.lane.b32.xlu0 %v225, 20
        %v255 = vpop.permute.xlu0 %254
        %256 = vrot.lane.b32.xlu0 %v228, 20
        %v257 = vpop.permute.xlu0 %256
        %258 = vrot.lane.b32.xlu0 %v231, 20
        %v259 = vpop.permute.xlu0 %258
        %260 = vrot.lane.b32.xlu0 %v234, 20
        %v261 = vpop.permute.xlu0 %260
        %262 = vrot.lane.b32.xlu0 %v237, 20
        %v263 = vpop.permute.xlu0 %262
        %264 = vrot.lane.b32.xlu0 %v240, 20
        %v265 = vpop.permute.xlu0 %264
        %266 = vrot.lane.b32.xlu0 %v243, 20
        %v267 = vpop.permute.xlu0 %266
        %v268 = vsel %vm207, %v245, %v195
        %v269 = vsel %vm207, %v247, %v196
        %v270 = vsel %vm207, %v249, %v197
        %v271 = vsel %vm207, %v251, %v198
        %v272 = vsel %vm207, %v253, %v199
        %v273 = vsel %vm207, %v255, %v200
        %v274 = vsel %vm207, %v257, %v201
        %v275 = vsel %vm207, %v259, %v202
        %v276 = vsel %vm207, %v261, %v203
        %v277 = vsel %vm207, %v263, %v204
        %v278 = vsel %vm207, %v265, %v205
        %v279 = vsel %vm207, %v267, %v206
        %v280 = vmul.f32 %v268, 0.13533528
        %v281 = vmul.f32 %v269, 0.13533528
        %v282 = vmul.f32 %v270, 0.13533528
        %v283 = vmul.f32 %v271, 0.13533528
        %v284 = vmul.f32 %v272, 0.13533528
        %v285 = vmul.f32 %v273, 0.13533528
        %v286 = vmul.f32 %v274, 0.13533528
        %v287 = vmul.f32 %v275, 0.13533528
        %v288 = vmul.f32 %v276, 0.13533528
        %v289 = vmul.f32 %v277, 0.13533528
        %v290 = vmul.f32 %v278, 0.13533528
        %v291 = vmul.f32 %v279, 0.13533528
        %304 = vrot.lane.b32.xlu0 %v280, 110
        %v305 = vpop.permute.xlu0 %304
        %306 = vrot.lane.b32.xlu0 %v281, 110
        %v307 = vpop.permute.xlu0 %306
        %308 = vrot.lane.b32.xlu0 %v282, 110
        %v309 = vpop.permute.xlu0 %308
        %310 = vrot.lane.b32.xlu0 %v283, 110
        %v311 = vpop.permute.xlu0 %310
        %312 = vrot.lane.b32.xlu0 %v284, 110
        %v313 = vpop.permute.xlu0 %312
        %314 = vrot.lane.b32.xlu0 %v285, 110
        %v315 = vpop.permute.xlu0 %314
        %316 = vrot.lane.b32.xlu0 %v286, 110
        %v317 = vpop.permute.xlu0 %316
        %318 = vrot.lane.b32.xlu0 %v287, 110
        %v319 = vpop.permute.xlu0 %318
        %320 = vrot.lane.b32.xlu0 %v288, 110
        %v321 = vpop.permute.xlu0 %320
        %322 = vrot.lane.b32.xlu0 %v289, 110
        %v323 = vpop.permute.xlu0 %322
        %324 = vrot.lane.b32.xlu0 %v290, 110
        %v325 = vpop.permute.xlu0 %324
        %326 = vrot.lane.b32.xlu0 %v291, 110
        %v327 = vpop.permute.xlu0 %326
        %v340 = vadd.f32 %v195, %v305
        %v341 = vadd.f32 %v196, %v307
        %v342 = vadd.f32 %v197, %v309
        %v343 = vadd.f32 %v198, %v311
        %v344 = vadd.f32 %v199, %v313
        %v345 = vadd.f32 %v200, %v315
        %v346 = vadd.f32 %v201, %v317
        %v347 = vadd.f32 %v202, %v319
        %v348 = vadd.f32 %v203, %v321
        %v349 = vadd.f32 %v204, %v323
        %v350 = vadd.f32 %v205, %v325
        %v351 = vadd.f32 %v206, %v327
        %v352 = vmul.f32 %v268, 0.60653067
        %v353 = vmul.f32 %v269, 0.60653067
        %v354 = vmul.f32 %v270, 0.60653067
        %v355 = vmul.f32 %v271, 0.60653067
        %v356 = vmul.f32 %v272, 0.60653067
        %v357 = vmul.f32 %v273, 0.60653067
        %v358 = vmul.f32 %v274, 0.60653067
        %v359 = vmul.f32 %v275, 0.60653067
        %v360 = vmul.f32 %v276, 0.60653067
        %v361 = vmul.f32 %v277, 0.60653067
        %v362 = vmul.f32 %v278, 0.60653067
        %v363 = vmul.f32 %v279, 0.60653067
        %376 = vrot.lane.b32.xlu0 %v352, 109
        %v377 = vpop.permute.xlu0 %376
        %378 = vrot.lane.b32.xlu0 %v353, 109
        %v379 = vpop.permute.xlu0 %378
        %380 = vrot.lane.b32.xlu0 %v354, 109
        %v381 = vpop.permute.xlu0 %380
        %382 = vrot.lane.b32.xlu0 %v355, 109
        %v383 = vpop.permute.xlu0 %382
        %384 = vrot.lane.b32.xlu0 %v356, 109
        %v385 = vpop.permute.xlu0 %384
        %386 = vrot.lane.b32.xlu0 %v357, 109
        %v387 = vpop.permute.xlu0 %386
        %388 = vrot.lane.b32.xlu0 %v358, 109
        %v389 = vpop.permute.xlu0 %388
        %390 = vrot.lane.b32.xlu0 %v359, 109
        %v391 = vpop.permute.xlu0 %390
        %392 = vrot.lane.b32.xlu0 %v360, 109
        %v393 = vpop.permute.xlu0 %392
        %394 = vrot.lane.b32.xlu0 %v361, 109
        %v395 = vpop.permute.xlu0 %394
        %396 = vrot.lane.b32.xlu0 %v362, 109
        %v397 = vpop.permute.xlu0 %396
        %398 = vrot.lane.b32.xlu0 %v363, 109
        %v399 = vpop.permute.xlu0 %398
        %v412 = vadd.f32 %v340, %v377
        %v413 = vadd.f32 %v341, %v379
        %v414 = vadd.f32 %v342, %v381
        %v415 = vadd.f32 %v343, %v383
        %v416 = vadd.f32 %v344, %v385
        %v417 = vadd.f32 %v345, %v387
        %v418 = vadd.f32 %v346, %v389
        %v419 = vadd.f32 %v347, %v391
        %v420 = vadd.f32 %v348, %v393
        %v421 = vadd.f32 %v349, %v395
        %v422 = vadd.f32 %v350, %v397
        %v423 = vadd.f32 %v351, %v399
        %424 = vrot.lane.b32.xlu0 %v352, 127
        %v425 = vpop.permute.xlu0 %424
        %426 = vrot.lane.b32.xlu0 %v353, 127
        %v427 = vpop.permute.xlu0 %426
        %428 = vrot.lane.b32.xlu0 %v354, 127
        %v429 = vpop.permute.xlu0 %428
        %430 = vrot.lane.b32.xlu0 %v355, 127
        %v431 = vpop.permute.xlu0 %430
        %432 = vrot.lane.b32.xlu0 %v356, 127
        %v433 = vpop.permute.xlu0 %432
        %434 = vrot.lane.b32.xlu0 %v357, 127
        %v435 = vpop.permute.xlu0 %434
        %436 = vrot.lane.b32.xlu0 %v358, 127
        %v437 = vpop.permute.xlu0 %436
        %438 = vrot.lane.b32.xlu0 %v359, 127
        %v439 = vpop.permute.xlu0 %438
        %440 = vrot.lane.b32.xlu0 %v360, 127
        %v441 = vpop.permute.xlu0 %440
        %442 = vrot.lane.b32.xlu0 %v361, 127
        %v443 = vpop.permute.xlu0 %442
        %444 = vrot.lane.b32.xlu0 %v362, 127
        %v445 = vpop.permute.xlu0 %444
        %446 = vrot.lane.b32.xlu0 %v363, 127
        %v447 = vpop.permute.xlu0 %446
        %v460 = vadd.f32 %v412, %v425
        %v461 = vadd.f32 %v413, %v427
        %v462 = vadd.f32 %v414, %v429
        %v463 = vadd.f32 %v415, %v431
        %v464 = vadd.f32 %v416, %v433
        %v465 = vadd.f32 %v417, %v435
        %v466 = vadd.f32 %v418, %v437
        %v467 = vadd.f32 %v419, %v439
        %v468 = vadd.f32 %v420, %v441
        %v469 = vadd.f32 %v421, %v443
        %v470 = vadd.f32 %v422, %v445
        %v471 = vadd.f32 %v423, %v447
        %472 = vrot.lane.b32.xlu0 %v280, 126
        %v473 = vpop.permute.xlu0 %472
        %474 = vrot.lane.b32.xlu0 %v281, 126
        %v475 = vpop.permute.xlu0 %474
        %476 = vrot.lane.b32.xlu0 %v282, 126
        %v477 = vpop.permute.xlu0 %476
        %478 = vrot.lane.b32.xlu0 %v283, 126
        %v479 = vpop.permute.xlu0 %478
        %480 = vrot.lane.b32.xlu0 %v284, 126
        %v481 = vpop.permute.xlu0 %480
        %482 = vrot.lane.b32.xlu0 %v285, 126
        %v483 = vpop.permute.xlu0 %482
        %484 = vrot.lane.b32.xlu0 %v286, 126
        %v485 = vpop.permute.xlu0 %484
        %486 = vrot.lane.b32.xlu0 %v287, 126
        %v487 = vpop.permute.xlu0 %486
        %488 = vrot.lane.b32.xlu0 %v288, 126
        %v489 = vpop.permute.xlu0 %488
        %490 = vrot.lane.b32.xlu0 %v289, 126
        %v491 = vpop.permute.xlu0 %490
        %492 = vrot.lane.b32.xlu0 %v290, 126
        %v493 = vpop.permute.xlu0 %492
        %494 = vrot.lane.b32.xlu0 %v291, 126
        %v495 = vpop.permute.xlu0 %494
        %v508 = vadd.f32 %v460, %v473
        %v509 = vadd.f32 %v461, %v475
        %v510 = vadd.f32 %v462, %v477
        %v511 = vadd.f32 %v463, %v479
        %v512 = vadd.f32 %v464, %v481
        %v513 = vadd.f32 %v465, %v483
        %v514 = vadd.f32 %v466, %v485
        %v515 = vadd.f32 %v467, %v487
        %v516 = vadd.f32 %v468, %v489
        %v517 = vadd.f32 %v469, %v491
        %v518 = vadd.f32 %v470, %v493
        %v519 = vadd.f32 %v471, %v495
        %520 = vst.msk [vmem:[#allocation3] sm:$0xff] %vm186, %v508
        %521 = vst.msk [vmem:[#allocation3 + $0x8] sm:$0xff] %vm186, %v509
        %vm522 = vcmask 125952
        %523 = vst.msk [vmem:[#allocation3 + $0x10] sm:$0xf] %vm522, %v510
        %524 = vst.msk [vmem:[#allocation3 + $0x18] sm:$0xff] %vm186, %v511
        %525 = vst.msk [vmem:[#allocation3 + $0x20] sm:$0xff] %vm186, %v512
        %526 = vst.msk [vmem:[#allocation3 + $0x28] sm:$0xf] %vm522, %v513
        %527 = vst.msk [vmem:[#allocation3 + $0x30] sm:$0xff] %vm186, %v514
        %528 = vst.msk [vmem:[#allocation3 + $0x38] sm:$0xff] %vm186, %v515
        %529 = vst.msk [vmem:[#allocation3 + $0x40] sm:$0xf] %vm522, %v516
        %530 = vst.msk [vmem:[#allocation3 + $0x48] sm:$0xff] %vm186, %v517
        %531 = vst.msk [vmem:[#allocation3 + $0x50] sm:$0xff] %vm186, %v518
        %532 = vst.msk [vmem:[#allocation3 + $0x58] sm:$0xf] %vm522, %v519
        %v533 = vld [vmem:[#allocation3 + $0x2] sm:$0xff]
        %v534 = vld [vmem:[#allocation3 + $0xa] sm:$0xff]
        %v535 = vld [vmem:[#allocation3 + $0x1a] sm:$0xff]
        %v536 = vld [vmem:[#allocation3 + $0x22] sm:$0xff]
        %v537 = vld [vmem:[#allocation3 + $0x32] sm:$0xff]
        %v538 = vld [vmem:[#allocation3 + $0x3a] sm:$0xff]
        %v539 = vld [vmem:[#allocation3 + $0x4a] sm:$0xff]
        %v540 = vld [vmem:[#allocation3 + $0x52] sm:$0xff]
        %v541 = vld [vmem:[#allocation3] sm:$0xff]
        %v542 = vld [vmem:[#allocation3 + $0x8] sm:$0xff]
        %v543 = vld [vmem:[#allocation3 + $0x18] sm:$0xff]
        %v544 = vld [vmem:[#allocation3 + $0x20] sm:$0xff]
        %v545 = vld [vmem:[#allocation3 + $0x30] sm:$0xff]
        %v546 = vld [vmem:[#allocation3 + $0x38] sm:$0xff]
        %v547 = vld [vmem:[#allocation3 + $0x48] sm:$0xff]
        %v548 = vld [vmem:[#allocation3 + $0x50] sm:$0xff]
        %v549 = vmul.f32 %v541, 0.13533528
        %v550 = vmul.f32 %v542, 0.13533528
        %v551 = vmul.f32 %v543, 0.13533528
        %v552 = vmul.f32 %v544, 0.13533528
        %v553 = vmul.f32 %v545, 0.13533528
        %v554 = vmul.f32 %v546, 0.13533528
        %v555 = vmul.f32 %v547, 0.13533528
        %v556 = vmul.f32 %v548, 0.13533528
        %v557 = vadd.f32 %v533, %v549
        %v558 = vadd.f32 %v534, %v550
        %v559 = vadd.f32 %v535, %v551
        %v560 = vadd.f32 %v536, %v552
        %v561 = vadd.f32 %v537, %v553
        %v562 = vadd.f32 %v538, %v554
        %v563 = vadd.f32 %v539, %v555
        %v564 = vadd.f32 %v540, %v556
        %v565 = vld [vmem:[#allocation3 + $0x1] sm:$0xff]
        %v566 = vld [vmem:[#allocation3 + $0x9] sm:$0xff]
        %v567 = vld [vmem:[#allocation3 + $0x19] sm:$0xff]
        %v568 = vld [vmem:[#allocation3 + $0x21] sm:$0xff]
        %v569 = vld [vmem:[#allocation3 + $0x31] sm:$0xff]
        %v570 = vld [vmem:[#allocation3 + $0x39] sm:$0xff]
        %v571 = vld [vmem:[#allocation3 + $0x49] sm:$0xff]
        %v572 = vld [vmem:[#allocation3 + $0x51] sm:$0xff]
        %v573 = vmul.f32 %v565, 0.60653067
        %v574 = vmul.f32 %v566, 0.60653067
        %v575 = vmul.f32 %v567, 0.60653067
        %v576 = vmul.f32 %v568, 0.60653067
        %v577 = vmul.f32 %v569, 0.60653067
        %v578 = vmul.f32 %v570, 0.60653067
        %v579 = vmul.f32 %v571, 0.60653067
        %v580 = vmul.f32 %v572, 0.60653067
        %v581 = vadd.f32 %v557, %v573
        %v582 = vadd.f32 %v558, %v574
        %v583 = vadd.f32 %v559, %v575
        %v584 = vadd.f32 %v560, %v576
        %v585 = vadd.f32 %v561, %v577
        %v586 = vadd.f32 %v562, %v578
        %v587 = vadd.f32 %v563, %v579
        %v588 = vadd.f32 %v564, %v580
        %v589 = vld [vmem:[#allocation3 + $0x3] sm:$0xff]
        %v590 = vld [vmem:[#allocation3 + $0xb] sm:$0xff]
        %v591 = vld [vmem:[#allocation3 + $0x1b] sm:$0xff]
        %v592 = vld [vmem:[#allocation3 + $0x23] sm:$0xff]
        %v593 = vld [vmem:[#allocation3 + $0x33] sm:$0xff]
        %v594 = vld [vmem:[#allocation3 + $0x3b] sm:$0xff]
        %v595 = vld [vmem:[#allocation3 + $0x4b] sm:$0xff]
        %v596 = vld [vmem:[#allocation3 + $0x53] sm:$0xff]
        %v597 = vmul.f32 %v589, 0.60653067
        %v598 = vmul.f32 %v590, 0.60653067
        %v599 = vmul.f32 %v591, 0.60653067
        %v600 = vmul.f32 %v592, 0.60653067
        %v601 = vmul.f32 %v593, 0.60653067
        %v602 = vmul.f32 %v594, 0.60653067
        %v603 = vmul.f32 %v595, 0.60653067
        %v604 = vmul.f32 %v596, 0.60653067
        %v605 = vadd.f32 %v581, %v597
        %v606 = vadd.f32 %v582, %v598
        %v607 = vadd.f32 %v583, %v599
        %v608 = vadd.f32 %v584, %v600
        %v609 = vadd.f32 %v585, %v601
        %v610 = vadd.f32 %v586, %v602
        %v611 = vadd.f32 %v587, %v603
        %v612 = vadd.f32 %v588, %v604
        %v613 = vld [vmem:[#allocation3 + $0x4] sm:$0xff]
        %v614 = vld [vmem:[#allocation3 + $0xc] sm:$0xff]
        %v615 = vld [vmem:[#allocation3 + $0x1c] sm:$0xff]
        %v616 = vld [vmem:[#allocation3 + $0x24] sm:$0xff]
        %v617 = vld [vmem:[#allocation3 + $0x34] sm:$0xff]
        %v618 = vld [vmem:[#allocation3 + $0x3c] sm:$0xff]
        %v619 = vld [vmem:[#allocation3 + $0x4c] sm:$0xff]
        %v620 = vld [vmem:[#allocation3 + $0x54] sm:$0xff]
        %v621 = vmul.f32 %v613, 0.13533528
        %v622 = vmul.f32 %v614, 0.13533528
        %v623 = vmul.f32 %v615, 0.13533528
        %v624 = vmul.f32 %v616, 0.13533528
        %v625 = vmul.f32 %v617, 0.13533528
        %v626 = vmul.f32 %v618, 0.13533528
        %v627 = vmul.f32 %v619, 0.13533528
        %v628 = vmul.f32 %v620, 0.13533528
        %v629 = vadd.f32 %v605, %v621
        %v630 = vadd.f32 %v606, %v622
        %v631 = vadd.f32 %v607, %v623
        %v632 = vadd.f32 %v608, %v624
        %v633 = vadd.f32 %v609, %v625
        %v634 = vadd.f32 %v610, %v626
        %v635 = vadd.f32 %v611, %v627
        %v636 = vadd.f32 %v612, %v628
        %637 = vst.msk [vmem:[%s155] sm:$0xff] %vm186, %v629
        %638 = vst.msk [vmem:[%s155 + $0x8] sm:$0xff] %vm186, %v630
        %639 = vst.msk [vmem:[%s155 + $0x10] sm:$0xff] %vm186, %v631
        %640 = vst.msk [vmem:[%s155 + $0x18] sm:$0xff] %vm186, %v632
        %641 = vst.msk [vmem:[%s155 + $0x20] sm:$0xff] %vm186, %v633
        %642 = vst.msk [vmem:[%s155 + $0x28] sm:$0xff] %vm186, %v634
        %643 = vst.msk [vmem:[%s155 + $0x30] sm:$0xff] %vm186, %v635
        %644 = vst.msk [vmem:[%s155 + $0x38] sm:$0xff] %vm186, %v636
        %s645 = sand.u32 %s68, 1
        %s646 = scalar_lea.sflag [#allocation6], %s645
        %s647 = sand.u32 %s68, 1
        %s648 = smul.addr %s647, 64
        %s649 = scalar_lea.vmem [#allocation7], %s648
        // Predicated region
        $region33: #{tpu_custom_call.1} parent=23 // pred_check
          %p650 = pneg %p78
        $region34: #{tpu_custom_call.1} parent=23 // pred_check_branch
          %652 = sbr.rel (%p650) target = $region36
        $region35: #{tpu_custom_call.1} parent=23 // pred_region
          %s653 = smul.u32 4, %s22
          %s654 = smul.u32 2, %s23
          %656 = vsyncadd %s646, 0
          %s657 = smul.addr %s653, 2
          %s658 = sadd.s32 %s654, %s657
          %s659 = smul.addr %s658, 8
          %s660 = scalar_lea.hbm %s1, %s659
          %s661 = sshll.u32 %s649, 4
          %s662 = int_to_ptr.vmem [resolvable:$true] %s661
          %s663 = sshll.u32 %s660, 4
          %s664 = int_to_ptr.hbm [resolvable:$true] %s663
          %669 = dma.vmem_to_hbm [thread:$0]  %s662, 1024, %s664, %s646, 128, 128, 8
        $region36: #{tpu_custom_call.1} parent=23 // pred_fallthru
          _
      $region24: #{tpu_custom_call.1} parent=5 // pred_fallthru
        _
      %p670 = scmp.le.s32.totalorder 2, %s13
      // Predicated region
      $region37: #{tpu_custom_call.1} parent=5 // pred_check
        %p671 = pneg %p670
      $region38: #{tpu_custom_call.1} parent=5 // pred_check_branch
        %673 = sbr.rel (%p671) target = $region40
      $region39: #{tpu_custom_call.1} parent=5 // pred_region
        %s674 = ssub.s32 %s13, 2
        // Predicated region
        $region41: #{tpu_custom_call.1} parent=39 // pred_check
          %p675 = pneg %p84
        $region42: #{tpu_custom_call.1} parent=39 // pred_check_branch
          %677 = sbr.rel (%p675) target = $region44
        $region43: #{tpu_custom_call.1} parent=39 // pred_region
          %s678 = sand.u32 %s69, 1
          %s679 = scalar_lea.sflag [#allocation6], %s678
          %s680 = sand.u32 %s69, 1
          %s681 = smul.addr %s680, 64
          %s682 = scalar_lea.vmem [#allocation7], %s681
          %684 = dma.done %s679, 1024
        $region44: #{tpu_custom_call.1} parent=39 // pred_fallthru
          _
      $region40: #{tpu_custom_call.1} parent=5 // pred_fallthru
        _
    $region6: #{tpu_custom_call.1} parent=1 // loop_footer
      %s17 = sadd.s32 1, %s13
    $region7: #{tpu_custom_call.1} parent=1 // loop_footer_branch
      %12 = sbr.rel target = $region3
    $region8: #{tpu_custom_call.1} parent=1 // loop_exit
      _
    %685 = vsyncpa [#allocation5], 1
    %s686 = scalar_lea.sflag [#allocation5], 1
    %687 = vsyncpa %s686, 1
    %688 = vsyncpa [#allocation6], 1
    %s689 = scalar_lea.sflag [#allocation6], 1
    %690 = vsyncpa %s689, 1

</llo_original>
